<compile_context>
chip_gen: v6e
topology: v6e:2x2x1
jax: 0.10.0
libtpu: 0.0.40
codegen_flags: <defaults>
</compile_context>

<pallas_src>
import functools

import jax
import jax.numpy as jnp
from jax import lax
from jax.experimental import pallas as pl
from jax.experimental.pallas import tpu as pltpu

_MIB = 1024 * 1024


def _vmem_limit(work_bytes):
    # 2x headroom, clamped to [4 MiB, 64 MiB] (64 MiB = v7x physical per-TC VMEM).
    return int(min(64 * _MIB, max(2 * work_bytes, 4 * _MIB)))


# ----------------------------------------------------------------------------
# Kernel 1: per-channel batch statistics (mean, biased variance) of the input.
# Only needed for BN1 (BN2's stats are fused into the first conv kernel).
# ----------------------------------------------------------------------------
def _bn_stats_kernel(x_ref, mean_ref, var_ref, sum_ref, sq_ref, *, count):
    i = pl.program_id(0)

    @pl.when(i == 0)
    def _():
        sum_ref[...] = jnp.zeros_like(sum_ref)
        sq_ref[...] = jnp.zeros_like(sq_ref)

    x = x_ref[...].astype(jnp.float32)                    # (chunk, C)
    sum_ref[...] += jnp.sum(x, axis=0, keepdims=True)     # (1, C)
    sq_ref[...] += jnp.sum(x * x, axis=0, keepdims=True)

    @pl.when(i == pl.num_programs(0) - 1)
    def _():
        inv = 1.0 / count
        mean = sum_ref[...] * inv
        mean_ref[...] = mean
        # TODO(synk): E[x^2] - mean^2 can cancel catastrophically for huge
        # reductions with |mean| >> std; use a two-pass/Welford variant there.
        var_ref[...] = sq_ref[...] * inv - mean * mean


def batch_stats(x_flat):
    """x_flat: (N, H*W, C) -> (mean (C,), biased var (C,)).

    Pure HBM streaming pass: flattened to (N*HW, C), 1-D grid, row chunks
    sized toward ~2 MB so the ~0.35 us per-step overhead is amortized.
    """
    N, HW, C = x_flat.shape
    rows = N * HW
    x2d = x_flat.reshape(rows, C)
    itemsize = jnp.dtype(x2d.dtype).itemsize

    target_rows = max(8, (2 * _MIB) // max(1, C * itemsize))
    cap = min(rows, max(8, target_rows))
    cands = [d for d in range(8, cap + 1, 8) if rows % d == 0]
    chunk = max(cands) if cands else rows                 # full-dim block is always legal
    n_chunks = rows // chunk

    work = 2 * chunk * C * itemsize + 8 * C * 4           # dbl-buf input + outs/scratch
    kernel = functools.partial(_bn_stats_kernel, count=float(rows))
    mean, var = pl.pallas_call(
        kernel,
        out_shape=(jax.ShapeDtypeStruct((1, C), jnp.float32),
                   jax.ShapeDtypeStruct((1, C), jnp.float32)),
        grid_spec=pltpu.PrefetchScalarGridSpec(
            num_scalar_prefetch=0,
            grid=(n_chunks,),
            in_specs=[pl.BlockSpec((chunk, C), lambda i: (i, 0))],
            out_specs=[pl.BlockSpec((1, C), lambda i: (0, 0)),
                       pl.BlockSpec((1, C), lambda i: (0, 0))],
            scratch_shapes=[pltpu.VMEM((1, C), jnp.float32),
                            pltpu.VMEM((1, C), jnp.float32)]),
        compiler_params=pltpu.CompilerParams(
            dimension_semantics=("arbitrary",),           # running accumulator
            vmem_limit_bytes=_vmem_limit(work)),
    )(x2d)
    return mean[0], var[0]


# ----------------------------------------------------------------------------
# Kernel 2: fused BN-affine + ReLU + 3x3 same-padding conv (groups=1, no bias),
# plus per-image sum / sum-of-squares of the conv output (for the next BN).
#
# The padded activation lives in a bf16 VMEM scratch whose halo border is
# zeroed each step and whose interior is overwritten; the conv is 3
# accumulating deep-K MXU matmuls (one per kernel row, K = 3*Cin).
# ----------------------------------------------------------------------------
def _bn_relu_conv_kernel(x_ref, scale_ref, shift_ref, w_ref,
                         o_ref, osum_ref, osq_ref, apad_ref, *, H, W):
    Cin = x_ref.shape[-1]

    # BN affine + ReLU in f32 on the (H*W, Cin) tile.
    x = x_ref[0].astype(jnp.float32)
    a = jnp.maximum(x * scale_ref[...] + shift_ref[...], 0.0)

    # Zero ONLY the halo border each step; the interior is fully overwritten
    # below. Per-step (not pl.program_id(0)==0 gated) so it remains correct
    # when the "parallel" N axis is sharded across TensorCores.
    zrow = jnp.zeros((1, W + 2, Cin), jnp.bfloat16)
    zcol = jnp.zeros((H, 1, Cin), jnp.bfloat16)
    apad_ref[pl.ds(0, 1), :, :] = zrow
    apad_ref[pl.ds(H + 1, 1), :, :] = zrow
    apad_ref[pl.ds(1, H), pl.ds(0, 1), :] = zcol
    apad_ref[pl.ds(1, H), pl.ds(W + 1, 1), :] = zcol

    # Interior write of the (bf16) activation.
    apad_ref[pl.ds(1, H), pl.ds(1, W), :] = (
        a.astype(jnp.bfloat16).reshape(H, W, Cin))

    # Per-kh accumulation: three MXU matmuls with K = 3*Cin each instead of a
    # single 9-tap concat -> 3x smaller im2col temporary in VMEM, and tap
    # extraction for kh+1 overlaps the drain of the kh matmul.
    acc = None
    for kh in range(3):
        taps = [apad_ref[pl.ds(kh, H), pl.ds(kw, W), :]   # (H, W, Cin) bf16
                for kw in range(3)]
        patches = jnp.concatenate(taps, axis=-1).reshape(H * W, 3 * Cin)
        part = jnp.dot(patches, w_ref[pl.ds(kh * 3 * Cin, 3 * Cin), :],
                       preferred_element_type=jnp.float32)
        acc = part if acc is None else acc + part         # (H*W, Cout) f32

    o_ref[0] = acc.astype(o_ref.dtype)
    # Fused BN2 statistics from the f32 accumulator while it is still in VMEM
    # (avoids a full HBM re-read of y). When y is stored in bf16, BN2
    # normalizes the bf16-rounded y with these f32 stats; the mismatch is far
    # below the bf16 rounding already present in the matmul operands.
    osum_ref[0] = jnp.sum(acc, axis=0, keepdims=True)
    osq_ref[0] = jnp.sum(acc * acc, axis=0, keepdims=True)


def bn_relu_conv(x_flat, gamma, beta, mean, var, w9, H, W,
                 eps=1e-5, out_dtype=jnp.bfloat16):
    """x_flat: (N, H*W, Cin), w9: (9*Cin, Cout) bf16 ->
       (y (N, H*W, Cout) out_dtype, mean_y (Cout,), var_y (Cout,))."""
    N, HW, Cin = x_flat.shape
    Cout = w9.shape[-1]
    assert HW == H * W

    scale = (gamma / jnp.sqrt(var + eps)).astype(jnp.float32)     # (Cin,)
    shift = (beta - mean * scale).astype(jnp.float32)
    scale = scale.reshape(1, Cin)
    shift = shift.reshape(1, Cin)

    in_bytes = jnp.dtype(x_flat.dtype).itemsize
    out_bytes = jnp.dtype(out_dtype).itemsize
    work = (2 * HW * Cin * in_bytes                # double-buffered input tile
            + 2 * HW * Cout * out_bytes            # double-buffered output tile
            + 2 * 9 * Cin * Cout * 2               # double-buffered bf16 weight
            + 4 * Cin * 4                          # scale / shift
            + 4 * 2 * Cout * 4                     # osum / osq tiles
            + (H + 2) * (W + 2) * Cin * 2          # padded activation scratch
            + HW * 3 * Cin * 2                     # per-kh im2col temporary
            + HW * Cout * 4)                       # f32 accumulator

    kernel = functools.partial(_bn_relu_conv_kernel, H=H, W=W)
    y, psum, psq = pl.pallas_call(
        kernel,
        out_shape=(jax.ShapeDtypeStruct((N, HW, Cout), out_dtype),
                   jax.ShapeDtypeStruct((N, 1, Cout), jnp.float32),
                   jax.ShapeDtypeStruct((N, 1, Cout), jnp.float32)),
        grid_spec=pltpu.PrefetchScalarGridSpec(
            num_scalar_prefetch=0,
            grid=(N,),
            in_specs=[
                pl.BlockSpec((1, HW, Cin), lambda n: (n, 0, 0)),
                pl.BlockSpec((1, Cin), lambda n: (0, 0)),
                pl.BlockSpec((1, Cin), lambda n: (0, 0)),
                pl.BlockSpec((9 * Cin, Cout), lambda n: (0, 0)),
            ],
            out_specs=[
                pl.BlockSpec((1, HW, Cout), lambda n: (n, 0, 0)),
                pl.BlockSpec((1, 1, Cout), lambda n: (n, 0, 0)),
                pl.BlockSpec((1, 1, Cout), lambda n: (n, 0, 0)),
            ],
            scratch_shapes=[pltpu.VMEM((H + 2, W + 2, Cin), jnp.bfloat16)]),
        compiler_params=pltpu.CompilerParams(
            dimension_semantics=("parallel",),
            vmem_limit_bytes=_vmem_limit(work)),
    )(x_flat, scale, shift, w9)
    # TODO(synk): for large ResNet stages (e.g. 56x56x256 on v7x's 64 MiB VMEM)
    # add a row-band grid axis with a 2-row halo instead of whole-image blocks,
    # single-buffer the constant weight/scale/shift inputs (pl.Buffered(1)),
    # pad Cin/Cout toward 128 lanes (or pack W into lanes) when channels are
    # small, and widen the scratch's left pad to 8 columns for sublane-aligned
    # interior stores once Cin is a multiple of 128.

    count = float(N * HW)
    s = jnp.sum(psum, axis=0)[0]                          # (Cout,)
    sq = jnp.sum(psq, axis=0)[0]
    mean_y = s / count
    var_y = sq / count - mean_y * mean_y
    return y, mean_y, var_y


def conv_weight_to_k9(w_oihw):
    """OIHW -> HWIO -> (kh*kw*Cin, Cout), bf16 for the MXU."""
    w = jnp.transpose(w_oihw, (2, 3, 1, 0))               # (3, 3, Cin, Cout)
    kh, kw, cin, cout = w.shape
    return w.reshape(kh * kw * cin, cout).astype(jnp.bfloat16)


# ----------------------------------------------------------------------------
# BasicBlock forward (NCHW in / NCHW out, like the PyTorch module).
# ----------------------------------------------------------------------------
def basic_block_forward(x_nchw, params):
    N, C, H, W = x_nchw.shape
    # TODO(synk): keep activations NHWC end-to-end in the surrounding model to
    # avoid these two full HBM transpose passes at the block boundary.
    x = jnp.transpose(x_nchw, (0, 2, 3, 1)).reshape(N, H * W, C)  # NHWC, flat

    mean1, var1 = batch_stats(x)
    # y1 stored in bf16: MXU operands are bf16 anyway and the block is HBM
    # bandwidth bound, so this halves inter-stage activation traffic.
    y1, mean2, var2 = bn_relu_conv(x, params["gamma1"], params["beta1"],
                                   mean1, var1, params["w1"], H, W,
                                   out_dtype=jnp.bfloat16)
    y2, _, _ = bn_relu_conv(y1, params["gamma2"], params["beta2"],
                            mean2, var2, params["w2"], H, W,
                            out_dtype=jnp.float32)

    Cout = y2.shape[-1]
    return jnp.transpose(y2.reshape(N, H, W, Cout), (0, 3, 1, 2))
    # TODO(synk): PyTorch training-mode BN also updates running_mean/var EMA
    # buffers (a module side effect); not materialized here.


# ----------------------------------------------------------------------------
# Pure-JAX reference (training-mode BN, f32 lax conv) for a correctness check.
# ----------------------------------------------------------------------------
def reference_forward(x_nchw, params, eps=1e-5):
    def bn_train(x, gamma, beta):
        mean = x.mean(axis=(0, 2, 3), keepdims=True)
        var = x.var(axis=(0, 2, 3), keepdims=True)        # biased
        g = gamma[None, :, None, None]
        b = beta[None, :, None, None]
        return (x - mean) / jnp.sqrt(var + eps) * g + b

    def conv(x, w_oihw):
        return lax.conv_general_dilated(
            x, w_oihw, window_strides=(1, 1), padding=((1, 1), (1, 1)),
            dimension_numbers=("NCHW", "OIHW", "NCHW"))

    h = jnp.maximum(bn_train(x_nchw, params["gamma1"], params["beta1"]), 0.0)
    h = conv(h, params["w1_oihw"])
    h = jnp.maximum(bn_train(h, params["gamma2"], params["beta2"]), 0.0)
    h = conv(h, params["w2_oihw"])
    return h


if __name__ == "__main__":
    N, C, H, W = 2, 4, 16, 16                             # in_channels == out_channels
    key = jax.random.PRNGKey(0)
    kx, kw1, kw2 = jax.random.split(key, 3)

    x = jax.random.normal(kx, (N, C, H, W), jnp.float32)
    w1_oihw = 0.1 * jax.random.normal(kw1, (C, C, 3, 3), jnp.float32)
    w2_oihw = 0.1 * jax.random.normal(kw2, (C, C, 3, 3), jnp.float32)

    params = {
        # BatchNorm2d default init: weight = 1, bias = 0
        "gamma1": jnp.ones((C,), jnp.float32),
        "beta1": jnp.zeros((C,), jnp.float32),
        "gamma2": jnp.ones((C,), jnp.float32),
        "beta2": jnp.zeros((C,), jnp.float32),
        # Conv weights: OIHW (reference) and folded (9*Cin, Cout) bf16 (kernel)
        "w1_oihw": w1_oihw,
        "w2_oihw": w2_oihw,
        "w1": conv_weight_to_k9(w1_oihw),
        "w2": conv_weight_to_k9(w2_oihw),
    }

    out = jax.block_until_ready(basic_block_forward(x, params))
    ref = reference_forward(x, params)

    assert out.shape == (N, C, H, W), out.shape
    err = jnp.abs(out - ref)
    max_err = float(jnp.max(err))
    mean_err = float(jnp.mean(err))
    # bf16 MXU operands + bf16 inter-stage activation (f32 accumulation and
    # f32 BN stats) stay well below these bounds; structural bugs (wrong tap
    # alignment, missing BN) produce O(0.3+) errors.
    assert max_err < 1e-1, f"mismatch vs reference, max_err={max_err}"
    assert mean_err < 1.5e-2, f"mismatch vs reference, mean_err={mean_err}"

    print("KERNEL_OK")
</pallas_src>

<mosaic_0001>
module attributes {stable_mosaic.version = 11 : i64} {
  func.func @_bn_stats_kernel(%arg0: i32, %arg1: memref<512x4xf32, #tpu.memory_space<vmem>>, %arg2: memref<1x4xf32, #tpu.memory_space<vmem>>, %arg3: memref<1x4xf32, #tpu.memory_space<vmem>>, %arg4: memref<1x4xf32, #tpu.memory_space<vmem>>, %arg5: memref<1x4xf32, #tpu.memory_space<vmem>>) attributes {dimension_semantics = [#tpu.dimension_semantics<arbitrary>], iteration_bounds = array<i64: 1>, scalar_prefetch = 0 : i64, scratch_operands = 2 : i64, tpu.core_type = #tpu.core_type<tc>, window_params = [{transform_indices = @transform_0, window_bounds = array<i64: 512, 4>}, {pipeline_mode = #tpu.pipeline_mode<synchronous>, transform_indices = @transform_1, window_bounds = array<i64: 1, 4>}, {pipeline_mode = #tpu.pipeline_mode<synchronous>, transform_indices = @transform_2, window_bounds = array<i64: 1, 4>}]} {
    %c0_i32 = arith.constant 0 : i32
    %0 = arith.cmpi eq, %arg0, %c0_i32 : i32
    %1 = arith.extui %0 : i1 to i32
    %c0_i32_0 = arith.constant 0 : i32
    %2 = arith.cmpi ne, %1, %c0_i32_0 : i32
    scf.if %2 {
      %cst_13 = arith.constant 0.000000e+00 : f32
      %18 = vector.broadcast %cst_13 : f32 to vector<1x4xf32>
      %c0_14 = arith.constant 0 : index
      %c0_15 = arith.constant 0 : index
      %19 = vector.load %arg4[%c0_14, %c0_15] : memref<1x4xf32, #tpu.memory_space<vmem>>, vector<1x4xf32>
      tpu.vector_store %arg4[%c0_14, %c0_15], %18 {strides = array<i32>} : memref<1x4xf32, #tpu.memory_space<vmem>>, vector<1x4xf32>,
      %cst_16 = arith.constant 0.000000e+00 : f32
      %20 = vector.broadcast %cst_16 : f32 to vector<1x4xf32>
      %c0_17 = arith.constant 0 : index
      %c0_18 = arith.constant 0 : index
      %21 = vector.load %arg5[%c0_17, %c0_18] : memref<1x4xf32, #tpu.memory_space<vmem>>, vector<1x4xf32>
      tpu.vector_store %arg5[%c0_17, %c0_18], %20 {strides = array<i32>} : memref<1x4xf32, #tpu.memory_space<vmem>>, vector<1x4xf32>,
    } else {
    }
    %c0 = arith.constant 0 : index
    %c0_1 = arith.constant 0 : index
    %3 = vector.load %arg1[%c0, %c0_1] : memref<512x4xf32, #tpu.memory_space<vmem>>, vector<512x4xf32>
    %c0_2 = arith.constant 0 : index
    %c0_3 = arith.constant 0 : index
    %4 = vector.load %arg4[%c0_2, %c0_3] : memref<1x4xf32, #tpu.memory_space<vmem>>, vector<1x4xf32>
    %cst = arith.constant dense<0.000000e+00> : vector<4xf32>
    %5 = vector.multi_reduction <add>, %3, %cst [0] : vector<512x4xf32> to vector<4xf32>
    %6 = vector.shape_cast %5 : vector<4xf32> to vector<1x4xf32>
    %7 = arith.addf %4, %6 : vector<1x4xf32>
    %c0_4 = arith.constant 0 : index
    %c0_5 = arith.constant 0 : index
    %8 = vector.load %arg4[%c0_4, %c0_5] : memref<1x4xf32, #tpu.memory_space<vmem>>, vector<1x4xf32>
    tpu.vector_store %arg4[%c0_4, %c0_5], %7 {strides = array<i32>} : memref<1x4xf32, #tpu.memory_space<vmem>>, vector<1x4xf32>,
    %c0_6 = arith.constant 0 : index
    %c0_7 = arith.constant 0 : index
    %9 = vector.load %arg5[%c0_6, %c0_7] : memref<1x4xf32, #tpu.memory_space<vmem>>, vector<1x4xf32>
    %10 = arith.mulf %3, %3 : vector<512x4xf32>
    %cst_8 = arith.constant dense<0.000000e+00> : vector<4xf32>
    %11 = vector.multi_reduction <add>, %10, %cst_8 [0] : vector<512x4xf32> to vector<4xf32>
    %12 = vector.shape_cast %11 : vector<4xf32> to vector<1x4xf32>
    %13 = arith.addf %9, %12 : vector<1x4xf32>
    %c0_9 = arith.constant 0 : index
    %c0_10 = arith.constant 0 : index
    %14 = vector.load %arg5[%c0_9, %c0_10] : memref<1x4xf32, #tpu.memory_space<vmem>>, vector<1x4xf32>
    tpu.vector_store %arg5[%c0_9, %c0_10], %13 {strides = array<i32>} : memref<1x4xf32, #tpu.memory_space<vmem>>, vector<1x4xf32>,
    %c0_i32_11 = arith.constant 0 : i32
    %15 = arith.cmpi eq, %arg0, %c0_i32_11 : i32
    %16 = arith.extui %15 : i1 to i32
    %c0_i32_12 = arith.constant 0 : i32
    %17 = arith.cmpi ne, %16, %c0_i32_12 : i32
    scf.if %17 {
      %c0_13 = arith.constant 0 : index
      %c0_14 = arith.constant 0 : index
      %18 = vector.load %arg4[%c0_13, %c0_14] : memref<1x4xf32, #tpu.memory_space<vmem>>, vector<1x4xf32>
      %cst_15 = arith.constant 0.001953125 : f32
      %19 = vector.broadcast %cst_15 : f32 to vector<1x4xf32>
      %20 = arith.mulf %18, %19 : vector<1x4xf32>
      %c0_16 = arith.constant 0 : index
      %c0_17 = arith.constant 0 : index
      %21 = vector.load %arg2[%c0_16, %c0_17] : memref<1x4xf32, #tpu.memory_space<vmem>>, vector<1x4xf32>
      tpu.vector_store %arg2[%c0_16, %c0_17], %20 {strides = array<i32>} : memref<1x4xf32, #tpu.memory_space<vmem>>, vector<1x4xf32>,
      %c0_18 = arith.constant 0 : index
      %c0_19 = arith.constant 0 : index
      %22 = vector.load %arg5[%c0_18, %c0_19] : memref<1x4xf32, #tpu.memory_space<vmem>>, vector<1x4xf32>
      %cst_20 = arith.constant 0.001953125 : f32
      %23 = vector.broadcast %cst_20 : f32 to vector<1x4xf32>
      %24 = arith.mulf %22, %23 : vector<1x4xf32>
      %25 = arith.mulf %20, %20 : vector<1x4xf32>
      %26 = arith.subf %24, %25 : vector<1x4xf32>
      %c0_21 = arith.constant 0 : index
      %c0_22 = arith.constant 0 : index
      %27 = vector.load %arg3[%c0_21, %c0_22] : memref<1x4xf32, #tpu.memory_space<vmem>>, vector<1x4xf32>
      tpu.vector_store %arg3[%c0_21, %c0_22], %26 {strides = array<i32>} : memref<1x4xf32, #tpu.memory_space<vmem>>, vector<1x4xf32>,
    } else {
    }
    return
  }
  func.func @transform_0(%arg0: i32) -> (i32, i32) {
    %c0_i32 = arith.constant 0 : i32
    %c0_i32_0 = arith.constant 0 : i32
    return %arg0, %c0_i32 : i32, i32
  }
  func.func @transform_1(%arg0: i32) -> (i32, i32) {
    %c0_i32 = arith.constant 0 : i32
    %c0_i32_0 = arith.constant 0 : i32
    %c0_i32_1 = arith.constant 0 : i32
    return %c0_i32, %c0_i32_0 : i32, i32
  }
  func.func @transform_2(%arg0: i32) -> (i32, i32) {
    %c0_i32 = arith.constant 0 : i32
    %c0_i32_0 = arith.constant 0 : i32
    %c0_i32_1 = arith.constant 0 : i32
    return %c0_i32, %c0_i32_0 : i32, i32
  }
}

</mosaic_0001>

<llo_original>
// kernel: tpu_custom_call.1
$region0: #{tpu_custom_call.1}
  #allocation0 [shape = 'u32[]', space=smem, size = 0x4, offset = 0x4, fixed_abs, tag = 'smem constant byte address 0x4 - core index']
  #allocation1 [shape = 'u32[144,128]{1,0:T(1,128)}', space=vmem, size = 0x12000, scoped, tag = 'internal scratch']
  #allocation2 [shape = 'f32[1,4]{1,0:T(1,128)}', space=vmem, size = 0x200, scoped, tag = 'scratch operand']
  #allocation3 [shape = 'f32[1,4]{1,0:T(1,128)}', space=vmem, size = 0x200, scoped, tag = 'scratch operand']
  %s0 = inlined_call_operand.vmem [shape: f32[512,4], index: 0, kind: input, shape index: {}]
  %s1 = inlined_call_operand.hbm [shape: f32[1,4], index: 1, kind: output, shape index: {0}]
  %s2 = inlined_call_operand.hbm [shape: f32[1,4], index: 2, kind: output, shape index: {1}]
  %3 = xla_tuple %s1, %s2
  %s4 = sld [smem:[#allocation0]]
  $region30: #{tpu_custom_call.1} parent=0
    _
  %s6 = ssub.s32 1, %s4
  %s7 = scalar_select 0, %s6, %s4
  $region1: #{tpu_custom_call.1} parent=0
    #allocation4 [shape = 'u8[512]{0}', space=vmem, size = 0x400, scoped, tag = 'output window, operand 0, single buffered']
    #allocation5 [shape = 's32[1]{0}', space=sflag, size = 0x4, scoped, tag = 'scoped memory for tpu_custom_call.1']
    #allocation6 [shape = 'u8[512]{0}', space=vmem, size = 0x400, scoped, tag = 'output window, operand 1, single buffered']
    #allocation7 [shape = 's32[1]{0}', space=sflag, size = 0x4, scoped, tag = 'scoped memory for tpu_custom_call.1']
    %8 = vsyncpa [#allocation5], 0
    %9 = vsyncpa [#allocation7], 0
    // Predicated region
    $region2: #{tpu_custom_call.1} parent=1 // pred_check
      _
    $region3: #{tpu_custom_call.1} parent=1 // pred_check_branch
      %11 = sbr.rel (0) target = $region5
    $region4: #{tpu_custom_call.1} parent=1 // pred_region
      _
    $region5: #{tpu_custom_call.1} parent=1 // pred_fallthru
      _
    %p12 = scmp.eq.s32.totalorder 0, 0
    // Predicated region
    $region6: #{tpu_custom_call.1} parent=1 // pred_check
      %p13 = pneg %p12
    $region7: #{tpu_custom_call.1} parent=1 // pred_check_branch
      %15 = sbr.rel (%p13) target = $region9
    $region8: #{tpu_custom_call.1} parent=1 // pred_region
      %vm16 = vcmask 24576
      %17 = vst.msk [vmem:[#allocation2] sm:$0x1] %vm16, 0.0
      %18 = vst.msk [vmem:[#allocation3] sm:$0x1] %vm16, 0.0
    $region9: #{tpu_custom_call.1} parent=1 // pred_fallthru
      _
    %v19 = vld [vmem:[%s0] sm:$0xff]
    %v20 = vld [vmem:[%s0 + $0x8] sm:$0xff]
    %v21 = vld [vmem:[%s0 + $0x10] sm:$0xff]
    %v22 = vld [vmem:[%s0 + $0x18] sm:$0xff]
    %v23 = vld [vmem:[%s0 + $0x20] sm:$0xff]
    %v24 = vld [vmem:[%s0 + $0x28] sm:$0xff]
    %v25 = vld [vmem:[%s0 + $0x30] sm:$0xff]
    %v26 = vld [vmem:[%s0 + $0x38] sm:$0xff]
    %v27 = vld [vmem:[%s0 + $0x40] sm:$0xff]
    %v28 = vld [vmem:[%s0 + $0x48] sm:$0xff]
    %v29 = vld [vmem:[%s0 + $0x50] sm:$0xff]
    %v30 = vld [vmem:[%s0 + $0x58] sm:$0xff]
    %v31 = vld [vmem:[%s0 + $0x60] sm:$0xff]
    %v32 = vld [vmem:[%s0 + $0x68] sm:$0xff]
    %v33 = vld [vmem:[%s0 + $0x70] sm:$0xff]
    %v34 = vld [vmem:[%s0 + $0x78] sm:$0xff]
    %v35 = vld [vmem:[%s0 + $0x80] sm:$0xff]
    %v36 = vld [vmem:[%s0 + $0x88] sm:$0xff]
    %v37 = vld [vmem:[%s0 + $0x90] sm:$0xff]
    %v38 = vld [vmem:[%s0 + $0x98] sm:$0xff]
    %v39 = vld [vmem:[%s0 + $0xa0] sm:$0xff]
    %v40 = vld [vmem:[%s0 + $0xa8] sm:$0xff]
    %v41 = vld [vmem:[%s0 + $0xb0] sm:$0xff]
    %v42 = vld [vmem:[%s0 + $0xb8] sm:$0xff]
    %v43 = vld [vmem:[%s0 + $0xc0] sm:$0xff]
    %v44 = vld [vmem:[%s0 + $0xc8] sm:$0xff]
    %v45 = vld [vmem:[%s0 + $0xd0] sm:$0xff]
    %v46 = vld [vmem:[%s0 + $0xd8] sm:$0xff]
    %v47 = vld [vmem:[%s0 + $0xe0] sm:$0xff]
    %v48 = vld [vmem:[%s0 + $0xe8] sm:$0xff]
    %v49 = vld [vmem:[%s0 + $0xf0] sm:$0xff]
    %v50 = vld [vmem:[%s0 + $0xf8] sm:$0xff]
    %v51 = vld [vmem:[%s0 + $0x100] sm:$0xff]
    %v52 = vld [vmem:[%s0 + $0x108] sm:$0xff]
    %v53 = vld [vmem:[%s0 + $0x110] sm:$0xff]
    %v54 = vld [vmem:[%s0 + $0x118] sm:$0xff]
    %v55 = vld [vmem:[%s0 + $0x120] sm:$0xff]
    %v56 = vld [vmem:[%s0 + $0x128] sm:$0xff]
    %v57 = vld [vmem:[%s0 + $0x130] sm:$0xff]
    %v58 = vld [vmem:[%s0 + $0x138] sm:$0xff]
    %v59 = vld [vmem:[%s0 + $0x140] sm:$0xff]
    %v60 = vld [vmem:[%s0 + $0x148] sm:$0xff]
    %v61 = vld [vmem:[%s0 + $0x150] sm:$0xff]
    %v62 = vld [vmem:[%s0 + $0x158] sm:$0xff]
    %v63 = vld [vmem:[%s0 + $0x160] sm:$0xff]
    %v64 = vld [vmem:[%s0 + $0x168] sm:$0xff]
    %v65 = vld [vmem:[%s0 + $0x170] sm:$0xff]
    %v66 = vld [vmem:[%s0 + $0x178] sm:$0xff]
    %v67 = vld [vmem:[%s0 + $0x180] sm:$0xff]
    %v68 = vld [vmem:[%s0 + $0x188] sm:$0xff]
    %v69 = vld [vmem:[%s0 + $0x190] sm:$0xff]
    %v70 = vld [vmem:[%s0 + $0x198] sm:$0xff]
    %v71 = vld [vmem:[%s0 + $0x1a0] sm:$0xff]
    %v72 = vld [vmem:[%s0 + $0x1a8] sm:$0xff]
    %v73 = vld [vmem:[%s0 + $0x1b0] sm:$0xff]
    %v74 = vld [vmem:[%s0 + $0x1b8] sm:$0xff]
    %v75 = vld [vmem:[%s0 + $0x1c0] sm:$0xff]
    %v76 = vld [vmem:[%s0 + $0x1c8] sm:$0xff]
    %v77 = vld [vmem:[%s0 + $0x1d0] sm:$0xff]
    %v78 = vld [vmem:[%s0 + $0x1d8] sm:$0xff]
    %v79 = vld [vmem:[%s0 + $0x1e0] sm:$0xff]
    %v80 = vld [vmem:[%s0 + $0x1e8] sm:$0xff]
    %v81 = vld [vmem:[%s0 + $0x1f0] sm:$0xff]
    %v82 = vld [vmem:[%s0 + $0x1f8] sm:$0xff]
    %v83 = vld [vmem:[#allocation2] sm:$0x1]
    %vm84 = vcmask 31744
    %v85 = vsel %vm84, %v19, 0.0
    %v86 = vsel %vm84, %v20, 0.0
    %v87 = vadd.f32 %v85, %v86
    %v88 = vsel %vm84, %v21, 0.0
    %v89 = vadd.f32 %v87, %v88
    %v90 = vsel %vm84, %v22, 0.0
    %v91 = vadd.f32 %v89, %v90
    %v92 = vsel %vm84, %v23, 0.0
    %v93 = vadd.f32 %v91, %v92
    %v94 = vsel %vm84, %v24, 0.0
    %v95 = vadd.f32 %v93, %v94
    %v96 = vsel %vm84, %v25, 0.0
    %v97 = vadd.f32 %v95, %v96
    %v98 = vsel %vm84, %v26, 0.0
    %v99 = vadd.f32 %v97, %v98
    %v100 = vsel %vm84, %v27, 0.0
    %v101 = vadd.f32 %v99, %v100
    %v102 = vsel %vm84, %v28, 0.0
    %v103 = vadd.f32 %v101, %v102
    %v104 = vsel %vm84, %v29, 0.0
    %v105 = vadd.f32 %v103, %v104
    %v106 = vsel %vm84, %v30, 0.0
    %v107 = vadd.f32 %v105, %v106
    %v108 = vsel %vm84, %v31, 0.0
    %v109 = vadd.f32 %v107, %v108
    %v110 = vsel %vm84, %v32, 0.0
    %v111 = vadd.f32 %v109, %v110
    %v112 = vsel %vm84, %v33, 0.0
    %v113 = vadd.f32 %v111, %v112
    %v114 = vsel %vm84, %v34, 0.0
    %v115 = vadd.f32 %v113, %v114
    %v116 = vsel %vm84, %v35, 0.0
    %v117 = vadd.f32 %v115, %v116
    %v118 = vsel %vm84, %v36, 0.0
    %v119 = vadd.f32 %v117, %v118
    %v120 = vsel %vm84, %v37, 0.0
    %v121 = vadd.f32 %v119, %v120
    %v122 = vsel %vm84, %v38, 0.0
    %v123 = vadd.f32 %v121, %v122
    %v124 = vsel %vm84, %v39, 0.0
    %v125 = vadd.f32 %v123, %v124
    %v126 = vsel %vm84, %v40, 0.0
    %v127 = vadd.f32 %v125, %v126
    %v128 = vsel %vm84, %v41, 0.0
    %v129 = vadd.f32 %v127, %v128
    %v130 = vsel %vm84, %v42, 0.0
    %v131 = vadd.f32 %v129, %v130
    %v132 = vsel %vm84, %v43, 0.0
    %v133 = vadd.f32 %v131, %v132
    %v134 = vsel %vm84, %v44, 0.0
    %v135 = vadd.f32 %v133, %v134
    %v136 = vsel %vm84, %v45, 0.0
    %v137 = vadd.f32 %v135, %v136
    %v138 = vsel %vm84, %v46, 0.0
    %v139 = vadd.f32 %v137, %v138
    %v140 = vsel %vm84, %v47, 0.0
    %v141 = vadd.f32 %v139, %v140
    %v142 = vsel %vm84, %v48, 0.0
    %v143 = vadd.f32 %v141, %v142
    %v144 = vsel %vm84, %v49, 0.0
    %v145 = vadd.f32 %v143, %v144
    %v146 = vsel %vm84, %v50, 0.0
    %v147 = vadd.f32 %v145, %v146
    %v148 = vsel %vm84, %v51, 0.0
    %v149 = vadd.f32 %v147, %v148
    %v150 = vsel %vm84, %v52, 0.0
    %v151 = vadd.f32 %v149, %v150
    %v152 = vsel %vm84, %v53, 0.0
    %v153 = vadd.f32 %v151, %v152
    %v154 = vsel %vm84, %v54, 0.0
    %v155 = vadd.f32 %v153, %v154
    %v156 = vsel %vm84, %v55, 0.0
    %v157 = vadd.f32 %v155, %v156
    %v158 = vsel %vm84, %v56, 0.0
    %v159 = vadd.f32 %v157, %v158
    %v160 = vsel %vm84, %v57, 0.0
    %v161 = vadd.f32 %v159, %v160
    %v162 = vsel %vm84, %v58, 0.0
    %v163 = vadd.f32 %v161, %v162
    %v164 = vsel %vm84, %v59, 0.0
    %v165 = vadd.f32 %v163, %v164
    %v166 = vsel %vm84, %v60, 0.0
    %v167 = vadd.f32 %v165, %v166
    %v168 = vsel %vm84, %v61, 0.0
    %v169 = vadd.f32 %v167, %v168
    %v170 = vsel %vm84, %v62, 0.0
    %v171 = vadd.f32 %v169, %v170
    %v172 = vsel %vm84, %v63, 0.0
    %v173 = vadd.f32 %v171, %v172
    %v174 = vsel %vm84, %v64, 0.0
    %v175 = vadd.f32 %v173, %v174
    %v176 = vsel %vm84, %v65, 0.0
    %v177 = vadd.f32 %v175, %v176
    %v178 = vsel %vm84, %v66, 0.0
    %v179 = vadd.f32 %v177, %v178
    %v180 = vsel %vm84, %v67, 0.0
    %v181 = vadd.f32 %v179, %v180
    %v182 = vsel %vm84, %v68, 0.0
    %v183 = vadd.f32 %v181, %v182
    %v184 = vsel %vm84, %v69, 0.0
    %v185 = vadd.f32 %v183, %v184
    %v186 = vsel %vm84, %v70, 0.0
    %v187 = vadd.f32 %v185, %v186
    %v188 = vsel %vm84, %v71, 0.0
    %v189 = vadd.f32 %v187, %v188
    %v190 = vsel %vm84, %v72, 0.0
    %v191 = vadd.f32 %v189, %v190
    %v192 = vsel %vm84, %v73, 0.0
    %v193 = vadd.f32 %v191, %v192
    %v194 = vsel %vm84, %v74, 0.0
    %v195 = vadd.f32 %v193, %v194
    %v196 = vsel %vm84, %v75, 0.0
    %v197 = vadd.f32 %v195, %v196
    %v198 = vsel %vm84, %v76, 0.0
    %v199 = vadd.f32 %v197, %v198
    %v200 = vsel %vm84, %v77, 0.0
    %v201 = vadd.f32 %v199, %v200
    %v202 = vsel %vm84, %v78, 0.0
    %v203 = vadd.f32 %v201, %v202
    %v204 = vsel %vm84, %v79, 0.0
    %v205 = vadd.f32 %v203, %v204
    %v206 = vsel %vm84, %v80, 0.0
    %v207 = vadd.f32 %v205, %v206
    %v208 = vsel %vm84, %v81, 0.0
    %v209 = vadd.f32 %v207, %v208
    %v210 = vsel %vm84, %v82, 0.0
    %v211 = vadd.f32 %v209, %v210
    %v212 = vrot.slane %v211, 4
    %v213 = vadd.f32 %v211, %v212
    %v214 = vrot.slane %v213, 2
    %v215 = vadd.f32 %v213, %v214
    %v216 = vrot.slane %v215, 1
    %v217 = vadd.f32 %v215, %v216
    %v218 = vadd.f32 %v83, %v217
    %vm219 = vcmask 24576
    %220 = vst.msk [vmem:[#allocation2] sm:$0x1] %vm219, %v218
    %v221 = vld [vmem:[#allocation3] sm:$0x1]
    %v222 = vmul.f32 %v19, %v19
    %v223 = vmul.f32 %v20, %v20
    %v224 = vmul.f32 %v21, %v21
    %v225 = vmul.f32 %v22, %v22
    %v226 = vmul.f32 %v23, %v23
    %v227 = vmul.f32 %v24, %v24
    %v228 = vmul.f32 %v25, %v25
    %v229 = vmul.f32 %v26, %v26
    %v230 = vmul.f32 %v27, %v27
    %v231 = vmul.f32 %v28, %v28
    %v232 = vmul.f32 %v29, %v29
    %v233 = vmul.f32 %v30, %v30
    %v234 = vmul.f32 %v31, %v31
    %v235 = vmul.f32 %v32, %v32
    %v236 = vmul.f32 %v33, %v33
    %v237 = vmul.f32 %v34, %v34
    %v238 = vmul.f32 %v35, %v35
    %v239 = vmul.f32 %v36, %v36
    %v240 = vmul.f32 %v37, %v37
    %v241 = vmul.f32 %v38, %v38
    %v242 = vmul.f32 %v39, %v39
    %v243 = vmul.f32 %v40, %v40
    %v244 = vmul.f32 %v41, %v41
    %v245 = vmul.f32 %v42, %v42
    %v246 = vmul.f32 %v43, %v43
    %v247 = vmul.f32 %v44, %v44
    %v248 = vmul.f32 %v45, %v45
    %v249 = vmul.f32 %v46, %v46
    %v250 = vmul.f32 %v47, %v47
    %v251 = vmul.f32 %v48, %v48
    %v252 = vmul.f32 %v49, %v49
    %v253 = vmul.f32 %v50, %v50
    %v254 = vmul.f32 %v51, %v51
    %v255 = vmul.f32 %v52, %v52
    %v256 = vmul.f32 %v53, %v53
    %v257 = vmul.f32 %v54, %v54
    %v258 = vmul.f32 %v55, %v55
    %v259 = vmul.f32 %v56, %v56
    %v260 = vmul.f32 %v57, %v57
    %v261 = vmul.f32 %v58, %v58
    %v262 = vmul.f32 %v59, %v59
    %v263 = vmul.f32 %v60, %v60
    %v264 = vmul.f32 %v61, %v61
    %v265 = vmul.f32 %v62, %v62
    %v266 = vmul.f32 %v63, %v63
    %v267 = vmul.f32 %v64, %v64
    %v268 = vmul.f32 %v65, %v65
    %v269 = vmul.f32 %v66, %v66
    %v270 = vmul.f32 %v67, %v67
    %v271 = vmul.f32 %v68, %v68
    %v272 = vmul.f32 %v69, %v69
    %v273 = vmul.f32 %v70, %v70
    %v274 = vmul.f32 %v71, %v71
    %v275 = vmul.f32 %v72, %v72
    %v276 = vmul.f32 %v73, %v73
    %v277 = vmul.f32 %v74, %v74
    %v278 = vmul.f32 %v75, %v75
    %v279 = vmul.f32 %v76, %v76
    %v280 = vmul.f32 %v77, %v77
    %v281 = vmul.f32 %v78, %v78
    %v282 = vmul.f32 %v79, %v79
    %v283 = vmul.f32 %v80, %v80
    %v284 = vmul.f32 %v81, %v81
    %v285 = vmul.f32 %v82, %v82
    %v286 = vsel %vm84, %v222, 0.0
    %v287 = vsel %vm84, %v223, 0.0
    %v288 = vadd.f32 %v286, %v287
    %v289 = vsel %vm84, %v224, 0.0
    %v290 = vadd.f32 %v288, %v289
    %v291 = vsel %vm84, %v225, 0.0
    %v292 = vadd.f32 %v290, %v291
    %v293 = vsel %vm84, %v226, 0.0
    %v294 = vadd.f32 %v292, %v293
    %v295 = vsel %vm84, %v227, 0.0
    %v296 = vadd.f32 %v294, %v295
    %v297 = vsel %vm84, %v228, 0.0
    %v298 = vadd.f32 %v296, %v297
    %v299 = vsel %vm84, %v229, 0.0
    %v300 = vadd.f32 %v298, %v299
    %v301 = vsel %vm84, %v230, 0.0
    %v302 = vadd.f32 %v300, %v301
    %v303 = vsel %vm84, %v231, 0.0
    %v304 = vadd.f32 %v302, %v303
    %v305 = vsel %vm84, %v232, 0.0
    %v306 = vadd.f32 %v304, %v305
    %v307 = vsel %vm84, %v233, 0.0
    %v308 = vadd.f32 %v306, %v307
    %v309 = vsel %vm84, %v234, 0.0
    %v310 = vadd.f32 %v308, %v309
    %v311 = vsel %vm84, %v235, 0.0
    %v312 = vadd.f32 %v310, %v311
    %v313 = vsel %vm84, %v236, 0.0
    %v314 = vadd.f32 %v312, %v313
    %v315 = vsel %vm84, %v237, 0.0
    %v316 = vadd.f32 %v314, %v315
    %v317 = vsel %vm84, %v238, 0.0
    %v318 = vadd.f32 %v316, %v317
    %v319 = vsel %vm84, %v239, 0.0
    %v320 = vadd.f32 %v318, %v319
    %v321 = vsel %vm84, %v240, 0.0
    %v322 = vadd.f32 %v320, %v321
    %v323 = vsel %vm84, %v241, 0.0
    %v324 = vadd.f32 %v322, %v323
    %v325 = vsel %vm84, %v242, 0.0
    %v326 = vadd.f32 %v324, %v325
    %v327 = vsel %vm84, %v243, 0.0
    %v328 = vadd.f32 %v326, %v327
    %v329 = vsel %vm84, %v244, 0.0
    %v330 = vadd.f32 %v328, %v329
    %v331 = vsel %vm84, %v245, 0.0
    %v332 = vadd.f32 %v330, %v331
    %v333 = vsel %vm84, %v246, 0.0
    %v334 = vadd.f32 %v332, %v333
    %v335 = vsel %vm84, %v247, 0.0
    %v336 = vadd.f32 %v334, %v335
    %v337 = vsel %vm84, %v248, 0.0
    %v338 = vadd.f32 %v336, %v337
    %v339 = vsel %vm84, %v249, 0.0
    %v340 = vadd.f32 %v338, %v339
    %v341 = vsel %vm84, %v250, 0.0
    %v342 = vadd.f32 %v340, %v341
    %v343 = vsel %vm84, %v251, 0.0
    %v344 = vadd.f32 %v342, %v343
    %v345 = vsel %vm84, %v252, 0.0
    %v346 = vadd.f32 %v344, %v345
    %v347 = vsel %vm84, %v253, 0.0
    %v348 = vadd.f32 %v346, %v347
    %v349 = vsel %vm84, %v254, 0.0
    %v350 = vadd.f32 %v348, %v349
    %v351 = vsel %vm84, %v255, 0.0
    %v352 = vadd.f32 %v350, %v351
    %v353 = vsel %vm84, %v256, 0.0
    %v354 = vadd.f32 %v352, %v353
    %v355 = vsel %vm84, %v257, 0.0
    %v356 = vadd.f32 %v354, %v355
    %v357 = vsel %vm84, %v258, 0.0
    %v358 = vadd.f32 %v356, %v357
    %v359 = vsel %vm84, %v259, 0.0
    %v360 = vadd.f32 %v358, %v359
    %v361 = vsel %vm84, %v260, 0.0
    %v362 = vadd.f32 %v360, %v361
    %v363 = vsel %vm84, %v261, 0.0
    %v364 = vadd.f32 %v362, %v363
    %v365 = vsel %vm84, %v262, 0.0
    %v366 = vadd.f32 %v364, %v365
    %v367 = vsel %vm84, %v263, 0.0
    %v368 = vadd.f32 %v366, %v367
    %v369 = vsel %vm84, %v264, 0.0
    %v370 = vadd.f32 %v368, %v369
    %v371 = vsel %vm84, %v265, 0.0
    %v372 = vadd.f32 %v370, %v371
    %v373 = vsel %vm84, %v266, 0.0
    %v374 = vadd.f32 %v372, %v373
    %v375 = vsel %vm84, %v267, 0.0
    %v376 = vadd.f32 %v374, %v375
    %v377 = vsel %vm84, %v268, 0.0
    %v378 = vadd.f32 %v376, %v377
    %v379 = vsel %vm84, %v269, 0.0
    %v380 = vadd.f32 %v378, %v379
    %v381 = vsel %vm84, %v270, 0.0
    %v382 = vadd.f32 %v380, %v381
    %v383 = vsel %vm84, %v271, 0.0
    %v384 = vadd.f32 %v382, %v383
    %v385 = vsel %vm84, %v272, 0.0
    %v386 = vadd.f32 %v384, %v385
    %v387 = vsel %vm84, %v273, 0.0
    %v388 = vadd.f32 %v386, %v387
    %v389 = vsel %vm84, %v274, 0.0
    %v390 = vadd.f32 %v388, %v389
    %v391 = vsel %vm84, %v275, 0.0
    %v392 = vadd.f32 %v390, %v391
    %v393 = vsel %vm84, %v276, 0.0
    %v394 = vadd.f32 %v392, %v393
    %v395 = vsel %vm84, %v277, 0.0
    %v396 = vadd.f32 %v394, %v395
    %v397 = vsel %vm84, %v278, 0.0
    %v398 = vadd.f32 %v396, %v397
    %v399 = vsel %vm84, %v279, 0.0
    %v400 = vadd.f32 %v398, %v399
    %v401 = vsel %vm84, %v280, 0.0
    %v402 = vadd.f32 %v400, %v401
    %v403 = vsel %vm84, %v281, 0.0
    %v404 = vadd.f32 %v402, %v403
    %v405 = vsel %vm84, %v282, 0.0
    %v406 = vadd.f32 %v404, %v405
    %v407 = vsel %vm84, %v283, 0.0
    %v408 = vadd.f32 %v406, %v407
    %v409 = vsel %vm84, %v284, 0.0
    %v410 = vadd.f32 %v408, %v409
    %v411 = vsel %vm84, %v285, 0.0
    %v412 = vadd.f32 %v410, %v411
    %v413 = vrot.slane %v412, 4
    %v414 = vadd.f32 %v412, %v413
    %v415 = vrot.slane %v414, 2
    %v416 = vadd.f32 %v414, %v415
    %v417 = vrot.slane %v416, 1
    %v418 = vadd.f32 %v416, %v417
    %v419 = vadd.f32 %v221, %v418
    %420 = vst.msk [vmem:[#allocation3] sm:$0x1] %vm219, %v419
    // Predicated region
    $region10: #{tpu_custom_call.1} parent=1 // pred_check
      %p421 = pneg %p12
    $region11: #{tpu_custom_call.1} parent=1 // pred_check_branch
      %423 = sbr.rel (%p421) target = $region13
    $region12: #{tpu_custom_call.1} parent=1 // pred_region
      %v424 = vld [vmem:[#allocation2] sm:$0x1]
      %v425 = vmul.f32 %v424, 0.001953125
      %426 = vst.msk [vmem:[#allocation4] sm:$0x1] %vm219, %v425
      %v427 = vld [vmem:[#allocation3] sm:$0x1]
      %v428 = vmul.f32 %v427, 0.001953125
      %v429 = vmul.f32 %v425, %v425
      %v430 = vsub.f32 %v428, %v429
      %431 = vst.msk [vmem:[#allocation6] sm:$0x1] %vm219, %v430
    $region13: #{tpu_custom_call.1} parent=1 // pred_fallthru
      _
    // Predicated region
    $region14: #{tpu_custom_call.1} parent=1 // pred_check
      _
    $region15: #{tpu_custom_call.1} parent=1 // pred_check_branch
      %433 = sbr.rel (0) target = $region17
    $region16: #{tpu_custom_call.1} parent=1 // pred_region
      %s435 = ssub.s32 16, 16
      %436 = vsyncadd [#allocation5], %s435
      %s438 = sshll.u32 [#allocation4], 4
      %s439 = int_to_ptr.vmem [resolvable:$true] %s438
      %441 = dma.vmem_to_hbm [thread:$0]  %s439, 16, %s1, [#allocation5]
    $region17: #{tpu_custom_call.1} parent=1 // pred_fallthru
      _
    // Predicated region
    $region18: #{tpu_custom_call.1} parent=1 // pred_check
      _
    $region19: #{tpu_custom_call.1} parent=1 // pred_check_branch
      %443 = sbr.rel (0) target = $region21
    $region20: #{tpu_custom_call.1} parent=1 // pred_region
      %s445 = ssub.s32 16, 16
      %446 = vsyncadd [#allocation7], %s445
      %s448 = sshll.u32 [#allocation6], 4
      %s449 = int_to_ptr.vmem [resolvable:$true] %s448
      %451 = dma.vmem_to_hbm [thread:$0]  %s449, 16, %s2, [#allocation7]
    $region21: #{tpu_custom_call.1} parent=1 // pred_fallthru
      _
    // Predicated region
    $region22: #{tpu_custom_call.1} parent=1 // pred_check
      _
    $region23: #{tpu_custom_call.1} parent=1 // pred_check_branch
      %453 = sbr.rel (0) target = $region25
    $region24: #{tpu_custom_call.1} parent=1 // pred_region
      %454 = dma.done [#allocation5], 16
    $region25: #{tpu_custom_call.1} parent=1 // pred_fallthru
      _
    // Predicated region
    $region26: #{tpu_custom_call.1} parent=1 // pred_check
      _
    $region27: #{tpu_custom_call.1} parent=1 // pred_check_branch
      %456 = sbr.rel (0) target = $region29
    $region28: #{tpu_custom_call.1} parent=1 // pred_region
      %457 = dma.done [#allocation7], 16
    $region29: #{tpu_custom_call.1} parent=1 // pred_fallthru
      _
    %458 = vsyncpa [#allocation5], 1
    %459 = vsyncpa [#allocation7], 1

</llo_original>
